<compile_context>
chip_gen: v5e
topology: v5e:2x2
jax: 0.10.0
libtpu: 0.0.40
codegen_flags: <defaults>
</compile_context>

<pallas_src>
import functools

import jax
import jax.numpy as jnp
import numpy as np
from jax.experimental import pallas as pl
from jax.experimental.pallas import tpu as pltpu

_LANES = 128
_CLASS_LABELS = (1, 2, 4)   # channel 1 <-> label 1, ch 2 <-> 2, ch 3 <-> 4


def _dice_sums_kernel(pred_ref, tgt_ref, num_ref, psum_ref, tsum_ref, *,
                      n_tiles, tile_rows, rem_elems, acc_rows):
    ti = pl.program_id(1)

    @pl.when(ti == 0)
    def _init():
        num_ref[...] = jnp.zeros_like(num_ref)
        psum_ref[...] = jnp.zeros_like(psum_ref)
        tsum_ref[...] = jnp.zeros_like(tsum_ref)

    p = pred_ref[0].astype(jnp.float32)          # (c, R, 128)
    t = tgt_ref[0]                               # (R, 128) int32

    # --- softmax over the channel axis: elementwise across c (R,128) slabs ---
    m = jnp.max(p, axis=0, keepdims=True)        # (1, R, 128)   VALU
    e = jnp.exp(p - m)                           # (c, R, 128)   EUP
    denom = jnp.sum(e, axis=0)                   # (R, 128)      VALU
    inv = pl.reciprocal(denom, approx=True)      # EUP slot, ~free
    inv = inv * (2.0 - denom * inv)              # one Newton step -> f32 acc.

    def rowsum(x):                               # (R,128) -> (acc_rows,128)
        if acc_rows == tile_rows:
            return x
        # Tile-aligned split of the sublane axis; leading-axis sum = VALU adds.
        return jnp.sum(x.reshape(tile_rows // acc_rows, acc_rows, _LANES),
                       axis=0)

    def accumulate(valid):
        for k, lab in enumerate(_CLASS_LABELS):
            sm_k = e[k + 1] * inv                        # softmax prob, (R,128)
            mask_k = (t == lab).astype(jnp.float32)      # one-hot target
            if valid is not None:
                # select (not multiply) so garbage columns cannot poison sums
                sm_k = jnp.where(valid, sm_k, 0.0)
                mask_k = jnp.where(valid, mask_k, 0.0)
            num_ref[0, k] += rowsum(sm_k * mask_k)       # sum(out * tgt)
            psum_ref[0, k] += rowsum(sm_k)               # sum(out)
            tsum_ref[0, k] += rowsum(mask_k)             # sum(tgt)

    if rem_elems == tile_rows * _LANES:
        # No ragged tail anywhere: single unmasked hot path.
        accumulate(None)
    else:
        def masked():
            row_idx = jax.lax.broadcasted_iota(jnp.int32, (tile_rows, _LANES), 0)
            lane_idx = jax.lax.broadcasted_iota(jnp.int32, (tile_rows, _LANES), 1)
            accumulate((row_idx * _LANES + lane_idx) < rem_elems)

        if n_tiles == 1:
            masked()
        else:
            # Only the last tile pays the masking cost.
            @pl.when(ti < n_tiles - 1)
            def _full():
                accumulate(None)

            @pl.when(ti == n_tiles - 1)
            def _ragged():
                masked()


def dice_loss(pred, target, eps=1e-5, tile_rows=2048):
    """pred: (b, num_class>=4, d, h, w) float; target: (b, d, h, w) int labels."""
    b, c, d, h, w = pred.shape
    assert c >= 4
    dhw = d * h * w

    rows_total = -(-dhw // _LANES)               # ceil(dhw / 128)
    padded = rows_total * _LANES

    # Free, contiguous reshapes (spatial-major, lane-dense).
    pred_flat = jnp.reshape(pred, (b, c, dhw))
    tgt_flat = jnp.reshape(target.astype(jnp.int32), (b, dhw))
    if padded != dhw:
        # TODO(synk): only hit when d*h*w % 128 != 0; this pad copies the data.
        pred_flat = jnp.pad(pred_flat, ((0, 0), (0, 0), (0, padded - dhw)))
        tgt_flat = jnp.pad(tgt_flat, ((0, 0), (0, padded - dhw)),
                           constant_values=-1)
    pred4 = jnp.reshape(pred_flat, (b, c, rows_total, _LANES))
    tgt3 = jnp.reshape(tgt_flat, (b, rows_total, _LANES))

    # Pick rows-per-step: full extent if it fits, else a multiple of 8.
    if rows_total <= tile_rows:
        tile_rows = rows_total
        n_tiles = 1
    else:
        tile_rows = max(8, (tile_rows // 8) * 8)
        n_tiles = -(-rows_total // tile_rows)

    rem_elems = dhw - (n_tiles - 1) * tile_rows * _LANES
    acc_rows = 8 if tile_rows % 8 == 0 else tile_rows

    kernel = functools.partial(_dice_sums_kernel, n_tiles=n_tiles,
                               tile_rows=tile_rows, rem_elems=rem_elems,
                               acc_rows=acc_rows)

    out_shape = tuple(
        jax.ShapeDtypeStruct((b, 3, acc_rows, _LANES), jnp.float32)
        for _ in range(3))
    out_spec = pl.BlockSpec((1, 3, acc_rows, _LANES),
                            lambda bi, ti: (bi, 0, 0, 0))

    num_o, p_o, t_o = pl.pallas_call(
        kernel,
        out_shape=out_shape,
        grid_spec=pltpu.PrefetchScalarGridSpec(
            num_scalar_prefetch=0,
            grid=(b, n_tiles),
            in_specs=[
                pl.BlockSpec((1, c, tile_rows, _LANES),
                             lambda bi, ti: (bi, 0, ti, 0)),
                pl.BlockSpec((1, tile_rows, _LANES),
                             lambda bi, ti: (bi, ti, 0)),
            ],
            out_specs=[out_spec, out_spec, out_spec]),
        compiler_params=pltpu.CompilerParams(
            dimension_semantics=("parallel", "arbitrary"),
            vmem_limit_bytes=48 * 1024 * 1024),
    )(pred4, tgt3)

    # Combine lane-wide per-batch partial sums (tiny glue reduction).
    num = 2.0 * jnp.sum(num_o, axis=(0, 2, 3))                       # (3,)
    den = (jnp.sum(p_o, axis=(0, 2, 3))
           + jnp.sum(t_o, axis=(0, 2, 3)) + eps)                     # (3,)
    dice = num / den                      # = 1 - loss_k
    losses = 1.0 - dice
    total = losses[0] + losses[1] + losses[2]
    return total, dice[0], dice[1], dice[2]


def _ref_dice_loss(pred, target, eps=1e-5):
    p = jax.nn.softmax(pred, axis=1)

    def dice(o, mk):
        num = 2.0 * (o * mk).sum()
        den = o.sum() + mk.sum() + eps
        return 1.0 - num / den

    l1 = dice(p[:, 1], (target == 1).astype(jnp.float32))
    l2 = dice(p[:, 2], (target == 2).astype(jnp.float32))
    l3 = dice(p[:, 3], (target == 4).astype(jnp.float32))
    return l1 + l2 + l3, 1.0 - l1, 1.0 - l2, 1.0 - l3


def _check(pred, target, **kw):
    out = jax.block_until_ready(dice_loss(pred, target, **kw))
    ref = _ref_dice_loss(pred, target)
    for got, want in zip(out, ref):
        assert np.allclose(np.asarray(got), np.asarray(want),
                           rtol=1e-4, atol=1e-5), (got, want)


if __name__ == "__main__":
    key = jax.random.PRNGKey(0)
    label_vals = jnp.array([0, 1, 2, 4], dtype=jnp.int32)

    # Main case: single full tile, no masking path.
    k1, k2, key = (*jax.random.split(key, 2), key)
    b, c, d, h, w = 2, 4, 4, 16, 16
    pred = jax.random.normal(k1, (b, c, d, h, w), dtype=jnp.float32)
    target = label_vals[jax.random.randint(k2, (b, d, h, w), 0, 4)]
    _check(pred, target)

    # Multi-tile + ragged last tile (exercises the pl.when masked path).
    k3, k4, key = (*jax.random.split(key, 2), key)
    pred2 = jax.random.normal(k3, (1, 4, 7, 16, 16), dtype=jnp.float32)
    target2 = label_vals[jax.random.randint(k4, (1, 7, 16, 16), 0, 4)]
    _check(pred2, target2, tile_rows=8)

    # d*h*w not a multiple of 128 (exercises the wrapper pad + mask).
    k5, k6, _ = (*jax.random.split(key, 2), key)
    pred3 = jax.random.normal(k5, (1, 4, 3, 5, 5), dtype=jnp.float32)
    target3 = label_vals[jax.random.randint(k6, (1, 3, 5, 5), 0, 4)]
    _check(pred3, target3)

    print("KERNEL_OK")
</pallas_src>

<mosaic_0001>
module attributes {stable_mosaic.version = 11 : i64} {
  func.func @_dice_sums_kernel(%arg0: i32, %arg1: i32, %arg2: memref<1x4x8x128xf32, #tpu.memory_space<vmem>>, %arg3: memref<1x8x128xi32, #tpu.memory_space<vmem>>, %arg4: memref<1x3x8x128xf32, #tpu.memory_space<vmem>>, %arg5: memref<1x3x8x128xf32, #tpu.memory_space<vmem>>, %arg6: memref<1x3x8x128xf32, #tpu.memory_space<vmem>>) attributes {dimension_semantics = [#tpu.dimension_semantics<parallel>, #tpu.dimension_semantics<arbitrary>], iteration_bounds = array<i64: 2, 1>, scalar_prefetch = 0 : i64, scratch_operands = 0 : i64, tpu.core_type = #tpu.core_type<tc>, window_params = [{transform_indices = @transform_0, window_bounds = array<i64: 1, 4, 8, 128>}, {transform_indices = @transform_1, window_bounds = array<i64: 1, 8, 128>}, {transform_indices = @transform_2, window_bounds = array<i64: 1, 3, 8, 128>}, {transform_indices = @transform_3, window_bounds = array<i64: 1, 3, 8, 128>}, {transform_indices = @transform_4, window_bounds = array<i64: 1, 3, 8, 128>}]} {
    %c0_i32 = arith.constant 0 : i32
    %0 = arith.cmpi eq, %arg1, %c0_i32 : i32
    %1 = arith.extui %0 : i1 to i32
    %c0_i32_0 = arith.constant 0 : i32
    %2 = arith.cmpi ne, %1, %c0_i32_0 : i32
    scf.if %2 {
      %cst_79 = arith.constant 0.000000e+00 : f32
      %96 = vector.broadcast %cst_79 : f32 to vector<1x3x8x128xf32>
      %c0_80 = arith.constant 0 : index
      %c0_81 = arith.constant 0 : index
      %c0_82 = arith.constant 0 : index
      %c0_83 = arith.constant 0 : index
      %97 = vector.load %arg4[%c0_80, %c0_81, %c0_82, %c0_83] : memref<1x3x8x128xf32, #tpu.memory_space<vmem>>, vector<1x3x8x128xf32>
      tpu.vector_store %arg4[%c0_80, %c0_81, %c0_82, %c0_83], %96 {strides = array<i32>} : memref<1x3x8x128xf32, #tpu.memory_space<vmem>>, vector<1x3x8x128xf32>,
      %cst_84 = arith.constant 0.000000e+00 : f32
      %98 = vector.broadcast %cst_84 : f32 to vector<1x3x8x128xf32>
      %c0_85 = arith.constant 0 : index
      %c0_86 = arith.constant 0 : index
      %c0_87 = arith.constant 0 : index
      %c0_88 = arith.constant 0 : index
      %99 = vector.load %arg5[%c0_85, %c0_86, %c0_87, %c0_88] : memref<1x3x8x128xf32, #tpu.memory_space<vmem>>, vector<1x3x8x128xf32>
      tpu.vector_store %arg5[%c0_85, %c0_86, %c0_87, %c0_88], %98 {strides = array<i32>} : memref<1x3x8x128xf32, #tpu.memory_space<vmem>>, vector<1x3x8x128xf32>,
      %cst_89 = arith.constant 0.000000e+00 : f32
      %100 = vector.broadcast %cst_89 : f32 to vector<1x3x8x128xf32>
      %c0_90 = arith.constant 0 : index
      %c0_91 = arith.constant 0 : index
      %c0_92 = arith.constant 0 : index
      %c0_93 = arith.constant 0 : index
      %101 = vector.load %arg6[%c0_90, %c0_91, %c0_92, %c0_93] : memref<1x3x8x128xf32, #tpu.memory_space<vmem>>, vector<1x3x8x128xf32>
      tpu.vector_store %arg6[%c0_90, %c0_91, %c0_92, %c0_93], %100 {strides = array<i32>} : memref<1x3x8x128xf32, #tpu.memory_space<vmem>>, vector<1x3x8x128xf32>,
    } else {
    }
    %c0 = arith.constant 0 : index
    %c0_1 = arith.constant 0 : index
    %c0_2 = arith.constant 0 : index
    %c0_3 = arith.constant 0 : index
    %3 = vector.load %arg2[%c0, %c0_1, %c0_2, %c0_3] : memref<1x4x8x128xf32, #tpu.memory_space<vmem>>, vector<1x4x8x128xf32>
    %4 = vector.shape_cast %3 : vector<1x4x8x128xf32> to vector<4x8x128xf32>
    %c0_4 = arith.constant 0 : index
    %c0_5 = arith.constant 0 : index
    %c0_6 = arith.constant 0 : index
    %5 = vector.load %arg3[%c0_4, %c0_5, %c0_6] : memref<1x8x128xi32, #tpu.memory_space<vmem>>, vector<1x8x128xi32>
    %6 = vector.shape_cast %5 : vector<1x8x128xi32> to vector<8x128xi32>
    %cst = arith.constant dense<0xFF800000> : vector<8x128xf32>
    %7 = vector.multi_reduction <maximumf>, %4, %cst [0] : vector<4x8x128xf32> to vector<8x128xf32>
    %8 = vector.shape_cast %7 : vector<8x128xf32> to vector<1x8x128xf32>
    %9 = vector.broadcast %8 : vector<1x8x128xf32> to vector<4x8x128xf32>
    %10 = arith.subf %4, %9 : vector<4x8x128xf32>
    %11 = math.exp %10 : vector<4x8x128xf32>
    %cst_7 = arith.constant dense<0.000000e+00> : vector<8x128xf32>
    %12 = vector.multi_reduction <add>, %11, %cst_7 [0] : vector<4x8x128xf32> to vector<8x128xf32>
    %13 = tpu.reciprocal %12 {approx = true} : vector<8x128xf32> -> vector<8x128xf32>
    %14 = arith.mulf %12, %13 : vector<8x128xf32>
    %cst_8 = arith.constant 2.000000e+00 : f32
    %15 = vector.broadcast %cst_8 : f32 to vector<8x128xf32>
    %16 = arith.subf %15, %14 : vector<8x128xf32>
    %17 = arith.mulf %13, %16 : vector<8x128xf32>
    %18 = vector.extract_strided_slice %11 {offsets = [1, 0, 0], sizes = [1, 8, 128], strides = [1, 1, 1]} : vector<4x8x128xf32> to vector<1x8x128xf32>
    %19 = vector.shape_cast %18 : vector<1x8x128xf32> to vector<8x128xf32>
    %20 = arith.mulf %19, %17 : vector<8x128xf32>
    %c1_i32 = arith.constant 1 : i32
    %21 = vector.broadcast %c1_i32 : i32 to vector<8x128xi32>
    %22 = arith.cmpi eq, %6, %21 : vector<8x128xi32>
    %23 = arith.extui %22 : vector<8x128xi1> to vector<8x128xi32>
    %24 = arith.sitofp %23 : vector<8x128xi32> to vector<8x128xf32>
    %c0_9 = arith.constant 0 : index
    %c0_10 = arith.constant 0 : index
    %c0_11 = arith.constant 0 : index
    %c0_12 = arith.constant 0 : index
    %25 = vector.load %arg4[%c0_9, %c0_10, %c0_11, %c0_12] : memref<1x3x8x128xf32, #tpu.memory_space<vmem>>, vector<1x1x8x128xf32>
    %26 = vector.shape_cast %25 : vector<1x1x8x128xf32> to vector<8x128xf32>
    %27 = arith.mulf %20, %24 : vector<8x128xf32>
    %28 = arith.addf %26, %27 : vector<8x128xf32>
    %c0_13 = arith.constant 0 : index
    %c0_14 = arith.constant 0 : index
    %c0_15 = arith.constant 0 : index
    %c0_16 = arith.constant 0 : index
    %29 = vector.load %arg4[%c0_13, %c0_14, %c0_15, %c0_16] : memref<1x3x8x128xf32, #tpu.memory_space<vmem>>, vector<1x1x8x128xf32>
    %30 = vector.shape_cast %29 : vector<1x1x8x128xf32> to vector<8x128xf32>
    %31 = vector.shape_cast %28 : vector<8x128xf32> to vector<1x1x8x128xf32>
    tpu.vector_store %arg4[%c0_13, %c0_14, %c0_15, %c0_16], %31 {strides = array<i32>} : memref<1x3x8x128xf32, #tpu.memory_space<vmem>>, vector<1x1x8x128xf32>,
    %c0_17 = arith.constant 0 : index
    %c0_18 = arith.constant 0 : index
    %c0_19 = arith.constant 0 : index
    %c0_20 = arith.constant 0 : index
    %32 = vector.load %arg5[%c0_17, %c0_18, %c0_19, %c0_20] : memref<1x3x8x128xf32, #tpu.memory_space<vmem>>, vector<1x1x8x128xf32>
    %33 = vector.shape_cast %32 : vector<1x1x8x128xf32> to vector<8x128xf32>
    %34 = arith.addf %33, %20 : vector<8x128xf32>
    %c0_21 = arith.constant 0 : index
    %c0_22 = arith.constant 0 : index
    %c0_23 = arith.constant 0 : index
    %c0_24 = arith.constant 0 : index
    %35 = vector.load %arg5[%c0_21, %c0_22, %c0_23, %c0_24] : memref<1x3x8x128xf32, #tpu.memory_space<vmem>>, vector<1x1x8x128xf32>
    %36 = vector.shape_cast %35 : vector<1x1x8x128xf32> to vector<8x128xf32>
    %37 = vector.shape_cast %34 : vector<8x128xf32> to vector<1x1x8x128xf32>
    tpu.vector_store %arg5[%c0_21, %c0_22, %c0_23, %c0_24], %37 {strides = array<i32>} : memref<1x3x8x128xf32, #tpu.memory_space<vmem>>, vector<1x1x8x128xf32>,
    %c0_25 = arith.constant 0 : index
    %c0_26 = arith.constant 0 : index
    %c0_27 = arith.constant 0 : index
    %c0_28 = arith.constant 0 : index
    %38 = vector.load %arg6[%c0_25, %c0_26, %c0_27, %c0_28] : memref<1x3x8x128xf32, #tpu.memory_space<vmem>>, vector<1x1x8x128xf32>
    %39 = vector.shape_cast %38 : vector<1x1x8x128xf32> to vector<8x128xf32>
    %40 = arith.addf %39, %24 : vector<8x128xf32>
    %c0_29 = arith.constant 0 : index
    %c0_30 = arith.constant 0 : index
    %c0_31 = arith.constant 0 : index
    %c0_32 = arith.constant 0 : index
    %41 = vector.load %arg6[%c0_29, %c0_30, %c0_31, %c0_32] : memref<1x3x8x128xf32, #tpu.memory_space<vmem>>, vector<1x1x8x128xf32>
    %42 = vector.shape_cast %41 : vector<1x1x8x128xf32> to vector<8x128xf32>
    %43 = vector.shape_cast %40 : vector<8x128xf32> to vector<1x1x8x128xf32>
    tpu.vector_store %arg6[%c0_29, %c0_30, %c0_31, %c0_32], %43 {strides = array<i32>} : memref<1x3x8x128xf32, #tpu.memory_space<vmem>>, vector<1x1x8x128xf32>,
    %44 = vector.extract_strided_slice %11 {offsets = [2, 0, 0], sizes = [1, 8, 128], strides = [1, 1, 1]} : vector<4x8x128xf32> to vector<1x8x128xf32>
    %45 = vector.shape_cast %44 : vector<1x8x128xf32> to vector<8x128xf32>
    %46 = arith.mulf %45, %17 : vector<8x128xf32>
    %c2_i32 = arith.constant 2 : i32
    %47 = vector.broadcast %c2_i32 : i32 to vector<8x128xi32>
    %48 = arith.cmpi eq, %6, %47 : vector<8x128xi32>
    %49 = arith.extui %48 : vector<8x128xi1> to vector<8x128xi32>
    %50 = arith.sitofp %49 : vector<8x128xi32> to vector<8x128xf32>
    %c0_33 = arith.constant 0 : index
    %c1 = arith.constant 1 : index
    %c0_34 = arith.constant 0 : index
    %c0_35 = arith.constant 0 : index
    %51 = vector.load %arg4[%c0_33, %c1, %c0_34, %c0_35] : memref<1x3x8x128xf32, #tpu.memory_space<vmem>>, vector<1x1x8x128xf32>
    %52 = vector.shape_cast %51 : vector<1x1x8x128xf32> to vector<8x128xf32>
    %53 = arith.mulf %46, %50 : vector<8x128xf32>
    %54 = arith.addf %52, %53 : vector<8x128xf32>
    %c0_36 = arith.constant 0 : index
    %c1_37 = arith.constant 1 : index
    %c0_38 = arith.constant 0 : index
    %c0_39 = arith.constant 0 : index
    %55 = vector.load %arg4[%c0_36, %c1_37, %c0_38, %c0_39] : memref<1x3x8x128xf32, #tpu.memory_space<vmem>>, vector<1x1x8x128xf32>
    %56 = vector.shape_cast %55 : vector<1x1x8x128xf32> to vector<8x128xf32>
    %57 = vector.shape_cast %54 : vector<8x128xf32> to vector<1x1x8x128xf32>
    tpu.vector_store %arg4[%c0_36, %c1_37, %c0_38, %c0_39], %57 {strides = array<i32>} : memref<1x3x8x128xf32, #tpu.memory_space<vmem>>, vector<1x1x8x128xf32>,
    %c0_40 = arith.constant 0 : index
    %c1_41 = arith.constant 1 : index
    %c0_42 = arith.constant 0 : index
    %c0_43 = arith.constant 0 : index
    %58 = vector.load %arg5[%c0_40, %c1_41, %c0_42, %c0_43] : memref<1x3x8x128xf32, #tpu.memory_space<vmem>>, vector<1x1x8x128xf32>
    %59 = vector.shape_cast %58 : vector<1x1x8x128xf32> to vector<8x128xf32>
    %60 = arith.addf %59, %46 : vector<8x128xf32>
    %c0_44 = arith.constant 0 : index
    %c1_45 = arith.constant 1 : index
    %c0_46 = arith.constant 0 : index
    %c0_47 = arith.constant 0 : index
    %61 = vector.load %arg5[%c0_44, %c1_45, %c0_46, %c0_47] : memref<1x3x8x128xf32, #tpu.memory_space<vmem>>, vector<1x1x8x128xf32>
    %62 = vector.shape_cast %61 : vector<1x1x8x128xf32> to vector<8x128xf32>
    %63 = vector.shape_cast %60 : vector<8x128xf32> to vector<1x1x8x128xf32>
    tpu.vector_store %arg5[%c0_44, %c1_45, %c0_46, %c0_47], %63 {strides = array<i32>} : memref<1x3x8x128xf32, #tpu.memory_space<vmem>>, vector<1x1x8x128xf32>,
    %c0_48 = arith.constant 0 : index
    %c1_49 = arith.constant 1 : index
    %c0_50 = arith.constant 0 : index
    %c0_51 = arith.constant 0 : index
    %64 = vector.load %arg6[%c0_48, %c1_49, %c0_50, %c0_51] : memref<1x3x8x128xf32, #tpu.memory_space<vmem>>, vector<1x1x8x128xf32>
    %65 = vector.shape_cast %64 : vector<1x1x8x128xf32> to vector<8x128xf32>
    %66 = arith.addf %65, %50 : vector<8x128xf32>
    %c0_52 = arith.constant 0 : index
    %c1_53 = arith.constant 1 : index
    %c0_54 = arith.constant 0 : index
    %c0_55 = arith.constant 0 : index
    %67 = vector.load %arg6[%c0_52, %c1_53, %c0_54, %c0_55] : memref<1x3x8x128xf32, #tpu.memory_space<vmem>>, vector<1x1x8x128xf32>
    %68 = vector.shape_cast %67 : vector<1x1x8x128xf32> to vector<8x128xf32>
    %69 = vector.shape_cast %66 : vector<8x128xf32> to vector<1x1x8x128xf32>
    tpu.vector_store %arg6[%c0_52, %c1_53, %c0_54, %c0_55], %69 {strides = array<i32>} : memref<1x3x8x128xf32, #tpu.memory_space<vmem>>, vector<1x1x8x128xf32>,
    %70 = vector.extract_strided_slice %11 {offsets = [3, 0, 0], sizes = [1, 8, 128], strides = [1, 1, 1]} : vector<4x8x128xf32> to vector<1x8x128xf32>
    %71 = vector.shape_cast %70 : vector<1x8x128xf32> to vector<8x128xf32>
    %72 = arith.mulf %71, %17 : vector<8x128xf32>
    %c4_i32 = arith.constant 4 : i32
    %73 = vector.broadcast %c4_i32 : i32 to vector<8x128xi32>
    %74 = arith.cmpi eq, %6, %73 : vector<8x128xi32>
    %75 = arith.extui %74 : vector<8x128xi1> to vector<8x128xi32>
    %76 = arith.sitofp %75 : vector<8x128xi32> to vector<8x128xf32>
    %c0_56 = arith.constant 0 : index
    %c2 = arith.constant 2 : index
    %c0_57 = arith.constant 0 : index
    %c0_58 = arith.constant 0 : index
    %77 = vector.load %arg4[%c0_56, %c2, %c0_57, %c0_58] : memref<1x3x8x128xf32, #tpu.memory_space<vmem>>, vector<1x1x8x128xf32>
    %78 = vector.shape_cast %77 : vector<1x1x8x128xf32> to vector<8x128xf32>
    %79 = arith.mulf %72, %76 : vector<8x128xf32>
    %80 = arith.addf %78, %79 : vector<8x128xf32>
    %c0_59 = arith.constant 0 : index
    %c2_60 = arith.constant 2 : index
    %c0_61 = arith.constant 0 : index
    %c0_62 = arith.constant 0 : index
    %81 = vector.load %arg4[%c0_59, %c2_60, %c0_61, %c0_62] : memref<1x3x8x128xf32, #tpu.memory_space<vmem>>, vector<1x1x8x128xf32>
    %82 = vector.shape_cast %81 : vector<1x1x8x128xf32> to vector<8x128xf32>
    %83 = vector.shape_cast %80 : vector<8x128xf32> to vector<1x1x8x128xf32>
    tpu.vector_store %arg4[%c0_59, %c2_60, %c0_61, %c0_62], %83 {strides = array<i32>} : memref<1x3x8x128xf32, #tpu.memory_space<vmem>>, vector<1x1x8x128xf32>,
    %c0_63 = arith.constant 0 : index
    %c2_64 = arith.constant 2 : index
    %c0_65 = arith.constant 0 : index
    %c0_66 = arith.constant 0 : index
    %84 = vector.load %arg5[%c0_63, %c2_64, %c0_65, %c0_66] : memref<1x3x8x128xf32, #tpu.memory_space<vmem>>, vector<1x1x8x128xf32>
    %85 = vector.shape_cast %84 : vector<1x1x8x128xf32> to vector<8x128xf32>
    %86 = arith.addf %85, %72 : vector<8x128xf32>
    %c0_67 = arith.constant 0 : index
    %c2_68 = arith.constant 2 : index
    %c0_69 = arith.constant 0 : index
    %c0_70 = arith.constant 0 : index
    %87 = vector.load %arg5[%c0_67, %c2_68, %c0_69, %c0_70] : memref<1x3x8x128xf32, #tpu.memory_space<vmem>>, vector<1x1x8x128xf32>
    %88 = vector.shape_cast %87 : vector<1x1x8x128xf32> to vector<8x128xf32>
    %89 = vector.shape_cast %86 : vector<8x128xf32> to vector<1x1x8x128xf32>
    tpu.vector_store %arg5[%c0_67, %c2_68, %c0_69, %c0_70], %89 {strides = array<i32>} : memref<1x3x8x128xf32, #tpu.memory_space<vmem>>, vector<1x1x8x128xf32>,
    %c0_71 = arith.constant 0 : index
    %c2_72 = arith.constant 2 : index
    %c0_73 = arith.constant 0 : index
    %c0_74 = arith.constant 0 : index
    %90 = vector.load %arg6[%c0_71, %c2_72, %c0_73, %c0_74] : memref<1x3x8x128xf32, #tpu.memory_space<vmem>>, vector<1x1x8x128xf32>
    %91 = vector.shape_cast %90 : vector<1x1x8x128xf32> to vector<8x128xf32>
    %92 = arith.addf %91, %76 : vector<8x128xf32>
    %c0_75 = arith.constant 0 : index
    %c2_76 = arith.constant 2 : index
    %c0_77 = arith.constant 0 : index
    %c0_78 = arith.constant 0 : index
    %93 = vector.load %arg6[%c0_75, %c2_76, %c0_77, %c0_78] : memref<1x3x8x128xf32, #tpu.memory_space<vmem>>, vector<1x1x8x128xf32>
    %94 = vector.shape_cast %93 : vector<1x1x8x128xf32> to vector<8x128xf32>
    %95 = vector.shape_cast %92 : vector<8x128xf32> to vector<1x1x8x128xf32>
    tpu.vector_store %arg6[%c0_75, %c2_76, %c0_77, %c0_78], %95 {strides = array<i32>} : memref<1x3x8x128xf32, #tpu.memory_space<vmem>>, vector<1x1x8x128xf32>,
    return
  }
  func.func @transform_0(%arg0: i32, %arg1: i32) -> (i32, i32, i32, i32) {
    %c0_i32 = arith.constant 0 : i32
    %c0_i32_0 = arith.constant 0 : i32
    %c0_i32_1 = arith.constant 0 : i32
    return %arg0, %c0_i32, %arg1, %c0_i32_0 : i32, i32, i32, i32
  }
  func.func @transform_1(%arg0: i32, %arg1: i32) -> (i32, i32, i32) {
    %c0_i32 = arith.constant 0 : i32
    %c0_i32_0 = arith.constant 0 : i32
    return %arg0, %arg1, %c0_i32 : i32, i32, i32
  }
  func.func @transform_2(%arg0: i32, %arg1: i32) -> (i32, i32, i32, i32) {
    %c0_i32 = arith.constant 0 : i32
    %c0_i32_0 = arith.constant 0 : i32
    %c0_i32_1 = arith.constant 0 : i32
    %c0_i32_2 = arith.constant 0 : i32
    return %arg0, %c0_i32, %c0_i32_0, %c0_i32_1 : i32, i32, i32, i32
  }
  func.func @transform_3(%arg0: i32, %arg1: i32) -> (i32, i32, i32, i32) {
    %c0_i32 = arith.constant 0 : i32
    %c0_i32_0 = arith.constant 0 : i32
    %c0_i32_1 = arith.constant 0 : i32
    %c0_i32_2 = arith.constant 0 : i32
    return %arg0, %c0_i32, %c0_i32_0, %c0_i32_1 : i32, i32, i32, i32
  }
  func.func @transform_4(%arg0: i32, %arg1: i32) -> (i32, i32, i32, i32) {
    %c0_i32 = arith.constant 0 : i32
    %c0_i32_0 = arith.constant 0 : i32
    %c0_i32_1 = arith.constant 0 : i32
    %c0_i32_2 = arith.constant 0 : i32
    return %arg0, %c0_i32, %c0_i32_0, %c0_i32_1 : i32, i32, i32, i32
  }
}

</mosaic_0001>

<llo_original>
// kernel: tpu_custom_call.1
$region0: #{tpu_custom_call.1}
  #allocation0 [shape = 'u32[]', space=smem, size = 0x4, offset = 0x4, fixed_abs, tag = 'smem constant byte address 0x4 - core index']
  #allocation1 [shape = 'u32[72,128]{1,0:T(1,128)}', space=vmem, size = 0x9000, scoped, tag = 'internal scratch']
  %s0 = inlined_call_operand.hbm [shape: f32[2,4,8,128], index: 0, kind: input, shape index: {}]
  %s1 = inlined_call_operand.hbm [shape: s32[2,8,128], index: 1, kind: input, shape index: {}]
  %s2 = inlined_call_operand.hbm [shape: f32[2,3,8,128], index: 2, kind: output, shape index: {0}]
  %s3 = inlined_call_operand.hbm [shape: f32[2,3,8,128], index: 3, kind: output, shape index: {1}]
  %s4 = inlined_call_operand.hbm [shape: f32[2,3,8,128], index: 4, kind: output, shape index: {2}]
  %5 = xla_tuple %s2, %s3, %s4
  %s6 = sld [smem:[#allocation0]]
  $region69: #{tpu_custom_call.1} parent=0
    _
  %s8 = ssub.s32 1, %s6
  %s9 = scalar_select 0, %s8, %s6
  $region1: #{tpu_custom_call.1} parent=0
    #allocation2 [shape = 'u8[32768]{0}', space=vmem, size = 0x8000, scoped, tag = 'input window, operand 0']
    #allocation3 [shape = 's32[2]{0}', space=sflag, size = 0x8, scoped, tag = 'scoped memory for tpu_custom_call.1']
    #allocation4 [shape = 's32[2]{0}', space=sflag, size = 0x8, scoped, tag = 'scoped memory for tpu_custom_call.1']
    #allocation5 [shape = 'u8[8192]{0}', space=vmem, size = 0x2000, scoped, tag = 'input window, operand 1']
    #allocation6 [shape = 's32[2]{0}', space=sflag, size = 0x8, scoped, tag = 'scoped memory for tpu_custom_call.1']
    #allocation7 [shape = 'u8[24576]{0}', space=vmem, size = 0x6000, scoped, tag = 'output window, operand 0']
    #allocation8 [shape = 'u8[24576]{0}', space=vmem, size = 0x6000, scoped, tag = 'output window, operand 1']
    #allocation9 [shape = 's32[2]{0}', space=sflag, size = 0x8, scoped, tag = 'scoped memory for tpu_custom_call.1']
    #allocation10 [shape = 'u8[24576]{0}', space=vmem, size = 0x6000, scoped, tag = 'output window, operand 2']
    %10 = vsyncpa [#allocation3], 0
    %s11 = scalar_lea.sflag [#allocation3], 1
    %12 = vsyncpa %s11, 0
    %13 = vsyncpa [#allocation6], 0
    %s14 = scalar_lea.sflag [#allocation6], 1
    %15 = vsyncpa %s14, 0
    %16 = vsyncpa [#allocation4], 0
    %s17 = scalar_lea.sflag [#allocation4], 1
    %18 = vsyncpa %s17, 0
    %19 = vsyncpa [#allocation9], 0
    %s20 = scalar_lea.sflag [#allocation9], 1
    %21 = vsyncpa %s20, 0
    loop: start=0, step=1, limit=4
    $region2: #{tpu_custom_call.1} parent=1 // loop_pre_header
      _
    $region3: #{tpu_custom_call.1} parent=1 // loop_header
      %s23 = sphi 0, %s27
      %p24 = scmp.ge.s32.totalorder %s23, 4
      %s30 = sphi 0, %s42
      %s31 = sphi 0, %s38
      %s32 = sphi 0, %s30
      %s33 = sphi 0, %s31
      %s34 = sphi 0, %s32
      %s35 = sphi 0, %s33
      %s47 = sphi 0, %s49
      %s50 = sphi 0, %s47
      %s51 = sphi 0, %s50
      %s67 = sphi 0, %s51
      %s75 = sphi 0, %s77
      %s78 = sphi 0, %s75
      %s79 = sphi 0, %s78
      %s95 = sphi 0, %s79
      %s101 = sphi 0, %s103
      %s104 = sphi 0, %s101
      %s105 = sphi 0, %s104
      %s121 = sphi 0, %s105
      %s127 = sphi 0, %s129
      %s130 = sphi 0, %s127
      %s131 = sphi 0, %s130
      %s147 = sphi 0, %s131
      %s153 = sphi 0, %s155
      %s156 = sphi 0, %s153
      %s157 = sphi 0, %s156
      %s173 = sphi 0, %s157
    $region4: #{tpu_custom_call.1} parent=1 // loop_header_branch
      %26 = sbr.rel (%p24) target = $region8
    $region5: #{tpu_custom_call.1} parent=1 // loop_body
      %s28 = ssub.s32 %s23, 1
      %s29 = ssub.s32 %s23, 2
      %s36 = sadd.s32 1, %s31
      %p37 = scmp.ge.s32.totalorder %s36, 1
      %s38 = scalar_select %p37, 0, %s36
      %s39 = sadd.s32 1, %s30
      %s40 = scalar_select %p37, %s39, %s30
      %p41 = scmp.ge.s32.totalorder %s40, 2
      %s42 = scalar_select %p41, 0, %s40
      %s43 = ssub.s32 %s30, %s42
      %s44 = ssub.s32 %s31, %s38
      %s45 = sor.u32 %s43, %s44
      %p46 = scmp.eq.s32.totalorder %s45, 0
      %s48 = sadd.s32 %s47, 1
      %s49 = scalar_select %p46, %s47, %s48
      %p52 = pneg %p46
      %p53 = scmp.eq.s32.totalorder %s23, 1
      %p54 = por %p52, %p53
      %p55 = scmp.ne.s32.totalorder %s47, %s50
      %p56 = scmp.eq.s32.totalorder %s23, 0
      %p57 = por %p55, %p56
      %p58 = scmp.ne.s32.totalorder %s47, %s50
      %p59 = scmp.eq.s32.totalorder %s28, 1
      %p60 = por %p58, %p59
      %p61 = scmp.ne.s32.totalorder %s50, %s51
      %p62 = scmp.eq.s32.totalorder %s28, 0
      %p63 = por %p61, %p62
      %p64 = scmp.ne.s32.totalorder %s50, %s51
      %p65 = scmp.eq.s32.totalorder %s29, 1
      %p66 = por %p64, %p65
      %p68 = scmp.ne.s32.totalorder %s51, %s67
      %p69 = scmp.eq.s32.totalorder %s29, 0
      %p70 = por %p68, %p69
      %s71 = ssub.s32 %s30, %s42
      %s72 = ssub.s32 %s31, %s38
      %s73 = sor.u32 %s71, %s72
      %p74 = scmp.eq.s32.totalorder %s73, 0
      %s76 = sadd.s32 %s75, 1
      %s77 = scalar_select %p74, %s75, %s76
      %p80 = pneg %p74
      %p81 = scmp.eq.s32.totalorder %s23, 1
      %p82 = por %p80, %p81
      %p83 = scmp.ne.s32.totalorder %s75, %s78
      %p84 = scmp.eq.s32.totalorder %s23, 0
      %p85 = por %p83, %p84
      %p86 = scmp.ne.s32.totalorder %s75, %s78
      %p87 = scmp.eq.s32.totalorder %s28, 1
      %p88 = por %p86, %p87
      %p89 = scmp.ne.s32.totalorder %s78, %s79
      %p90 = scmp.eq.s32.totalorder %s28, 0
      %p91 = por %p89, %p90
      %p92 = scmp.ne.s32.totalorder %s78, %s79
      %p93 = scmp.eq.s32.totalorder %s29, 1
      %p94 = por %p92, %p93
      %p96 = scmp.ne.s32.totalorder %s79, %s95
      %p97 = scmp.eq.s32.totalorder %s29, 0
      %p98 = por %p96, %p97
      %s99 = ssub.s32 %s30, %s42
      %p100 = scmp.eq.s32.totalorder %s99, 0
      %s102 = sadd.s32 %s101, 1
      %s103 = scalar_select %p100, %s101, %s102
      %p106 = pneg %p100
      %p107 = scmp.eq.s32.totalorder %s23, 1
      %p108 = por %p106, %p107
      %p109 = scmp.ne.s32.totalorder %s101, %s104
      %p110 = scmp.eq.s32.totalorder %s23, 0
      %p111 = por %p109, %p110
      %p112 = scmp.ne.s32.totalorder %s101, %s104
      %p113 = scmp.eq.s32.totalorder %s28, 1
      %p114 = por %p112, %p113
      %p115 = scmp.ne.s32.totalorder %s104, %s105
      %p116 = scmp.eq.s32.totalorder %s28, 0
      %p117 = por %p115, %p116
      %p118 = scmp.ne.s32.totalorder %s104, %s105
      %p119 = scmp.eq.s32.totalorder %s29, 1
      %p120 = por %p118, %p119
      %p122 = scmp.ne.s32.totalorder %s105, %s121
      %p123 = scmp.eq.s32.totalorder %s29, 0
      %p124 = por %p122, %p123
      %s125 = ssub.s32 %s30, %s42
      %p126 = scmp.eq.s32.totalorder %s125, 0
      %s128 = sadd.s32 %s127, 1
      %s129 = scalar_select %p126, %s127, %s128
      %p132 = pneg %p126
      %p133 = scmp.eq.s32.totalorder %s23, 1
      %p134 = por %p132, %p133
      %p135 = scmp.ne.s32.totalorder %s127, %s130
      %p136 = scmp.eq.s32.totalorder %s23, 0
      %p137 = por %p135, %p136
      %p138 = scmp.ne.s32.totalorder %s127, %s130
      %p139 = scmp.eq.s32.totalorder %s28, 1
      %p140 = por %p138, %p139
      %p141 = scmp.ne.s32.totalorder %s130, %s131
      %p142 = scmp.eq.s32.totalorder %s28, 0
      %p143 = por %p141, %p142
      %p144 = scmp.ne.s32.totalorder %s130, %s131
      %p145 = scmp.eq.s32.totalorder %s29, 1
      %p146 = por %p144, %p145
      %p148 = scmp.ne.s32.totalorder %s131, %s147
      %p149 = scmp.eq.s32.totalorder %s29, 0
      %p150 = por %p148, %p149
      %s151 = ssub.s32 %s30, %s42
      %p152 = scmp.eq.s32.totalorder %s151, 0
      %s154 = sadd.s32 %s153, 1
      %s155 = scalar_select %p152, %s153, %s154
      %p158 = pneg %p152
      %p159 = scmp.eq.s32.totalorder %s23, 1
      %p160 = por %p158, %p159
      %p161 = scmp.ne.s32.totalorder %s153, %s156
      %p162 = scmp.eq.s32.totalorder %s23, 0
      %p163 = por %p161, %p162
      %p164 = scmp.ne.s32.totalorder %s153, %s156
      %p165 = scmp.eq.s32.totalorder %s28, 1
      %p166 = por %p164, %p165
      %p167 = scmp.ne.s32.totalorder %s156, %s157
      %p168 = scmp.eq.s32.totalorder %s28, 0
      %p169 = por %p167, %p168
      %p170 = scmp.ne.s32.totalorder %s156, %s157
      %p171 = scmp.eq.s32.totalorder %s29, 1
      %p172 = por %p170, %p171
      %p174 = scmp.ne.s32.totalorder %s157, %s173
      %p175 = scmp.eq.s32.totalorder %s29, 0
      %p176 = por %p174, %p175
      %p177 = scmp.le.s32.totalorder 1, %s23
      %p178 = scmp.lt.s32.totalorder %s23, 3
      %p179 = pnand %p177, %p178
      %p180 = pneg %p179
      // Predicated region
      $region9: #{tpu_custom_call.1} parent=5 // pred_check
        _
      $region10: #{tpu_custom_call.1} parent=5 // pred_check_branch
        %182 = sbr.rel (%p179) target = $region12
      $region11: #{tpu_custom_call.1} parent=5 // pred_region
        %s183 = ssub.s32 %s23, 1
      $region12: #{tpu_custom_call.1} parent=5 // pred_fallthru
        _
      %p184 = scmp.lt.s32.totalorder %s23, 2
      // Predicated region
      $region13: #{tpu_custom_call.1} parent=5 // pred_check
        %p185 = pneg %p184
      $region14: #{tpu_custom_call.1} parent=5 // pred_check_branch
        %187 = sbr.rel (%p185) target = $region16
      $region15: #{tpu_custom_call.1} parent=5 // pred_region
        // Predicated region
        $region17: #{tpu_custom_call.1} parent=15 // pred_check
          %p188 = pneg %p57
        $region18: #{tpu_custom_call.1} parent=15 // pred_check_branch
          %190 = sbr.rel (%p188) target = $region20
        $region19: #{tpu_custom_call.1} parent=15 // pred_region
          %s191 = sand.u32 %s47, 1
          %s192 = scalar_lea.sflag [#allocation3], %s191
          %s193 = sand.u32 %s47, 1
          %s194 = smul.addr %s193, 32
          %s195 = scalar_lea.vmem [#allocation2], %s194
          %197 = vsyncadd %s192, 0
          %s198 = smul.addr %s30, 4
          %s199 = sadd.s32 %s31, %s198
          %s200 = smul.addr %s199, 8
          %s201 = scalar_lea.hbm %s0, %s200
          %s202 = sshll.u32 %s201, 4
          %s203 = int_to_ptr.hbm [resolvable:$true] %s202
          %s204 = sshll.u32 %s195, 4
          %s205 = int_to_ptr.vmem [resolvable:$true] %s204
          %210 = dma.hbm_to_vmem [thread:$0]  %s203, 512, %s205, %s192, 128, 128, 8
        $region20: #{tpu_custom_call.1} parent=15 // pred_fallthru
          _
        // Predicated region
        $region21: #{tpu_custom_call.1} parent=15 // pred_check
          %p211 = pneg %p85
        $region22: #{tpu_custom_call.1} parent=15 // pred_check_branch
          %213 = sbr.rel (%p211) target = $region24
        $region23: #{tpu_custom_call.1} parent=15 // pred_region
          %s214 = sand.u32 %s75, 1
          %s215 = scalar_lea.sflag [#allocation6], %s214
          %s216 = sand.u32 %s75, 1
          %s217 = smul.addr %s216, 8
          %s218 = scalar_lea.vmem [#allocation5], %s217
          %220 = vsyncadd %s215, 0
          %s221 = sadd.s32 %s31, %s30
          %s222 = smul.addr %s221, 8
          %s223 = scalar_lea.hbm %s1, %s222
          %s225 = sshll.u32 %s223, 4
          %s226 = int_to_ptr.hbm [resolvable:$true] %s225
          %s227 = sshll.u32 %s218, 4
          %s228 = int_to_ptr.vmem [resolvable:$true] %s227
          %230 = dma.hbm_to_vmem [thread:$0]  %s226, 128, %s228, %s215
        $region24: #{tpu_custom_call.1} parent=15 // pred_fallthru
          _
      $region16: #{tpu_custom_call.1} parent=5 // pred_fallthru
        _
      %p231 = scmp.le.s32.totalorder 1, %s23
      %p232 = scmp.lt.s32.totalorder %s23, 3
      %p233 = pnand %p231, %p232
      %p234 = pneg %p233
      // Predicated region
      $region25: #{tpu_custom_call.1} parent=5 // pred_check
        _
      $region26: #{tpu_custom_call.1} parent=5 // pred_check_branch
        %236 = sbr.rel (%p233) target = $region28
      $region27: #{tpu_custom_call.1} parent=5 // pred_region
        %s237 = ssub.s32 %s23, 1
        %s238 = sand.u32 %s50, 1
        %s239 = scalar_lea.sflag [#allocation3], %s238
        %s240 = sand.u32 %s50, 1
        %s241 = smul.addr %s240, 32
        %s242 = scalar_lea.vmem [#allocation2], %s241
        // Predicated region
        $region29: #{tpu_custom_call.1} parent=27 // pred_check
          %p243 = pneg %p63
        $region30: #{tpu_custom_call.1} parent=27 // pred_check_branch
          %245 = sbr.rel (%p243) target = $region32
        $region31: #{tpu_custom_call.1} parent=27 // pred_region
          %247 = dma.done %s239, 512
        $region32: #{tpu_custom_call.1} parent=27 // pred_fallthru
          _
        %s248 = sand.u32 %s78, 1
        %s249 = scalar_lea.sflag [#allocation6], %s248
        %s250 = sand.u32 %s78, 1
        %s251 = smul.addr %s250, 8
        %s252 = scalar_lea.vmem [#allocation5], %s251
        // Predicated region
        $region33: #{tpu_custom_call.1} parent=27 // pred_check
          %p253 = pneg %p91
        $region34: #{tpu_custom_call.1} parent=27 // pred_check_branch
          %255 = sbr.rel (%p253) target = $region36
        $region35: #{tpu_custom_call.1} parent=27 // pred_region
          %257 = dma.done %s249, 128
        $region36: #{tpu_custom_call.1} parent=27 // pred_fallthru
          _
        %s258 = sand.u32 %s50, 1
        %s259 = scalar_lea.sflag [#allocation3], %s258
        %s260 = sand.u32 %s50, 1
        %s261 = smul.addr %s260, 32
        %s262 = scalar_lea.vmem [#allocation2], %s261
        %p263 = pneg %p63
        %p264 = pneg %p60
        %s265 = sand.u32 %s78, 1
        %s266 = scalar_lea.sflag [#allocation6], %s265
        %s267 = sand.u32 %s78, 1
        %s268 = smul.addr %s267, 8
        %s269 = scalar_lea.vmem [#allocation5], %s268
        %p270 = pneg %p91
        %p271 = pneg %p88
        %p272 = pneg %p117
        %p273 = pneg %p114
        %s274 = sand.u32 %s104, 1
        %s275 = scalar_lea.sflag [#allocation4], %s274
        %s276 = sand.u32 %s104, 1
        %s277 = smul.addr %s276, 24
        %s278 = scalar_lea.vmem [#allocation7], %s277
        %p279 = pneg %p143
        %p280 = pneg %p140
        %s281 = sand.u32 %s28, 1
        %s282 = scalar_lea.sflag [#allocation9], %s281
        %s283 = sand.u32 %s130, 1
        %s284 = smul.addr %s283, 24
        %s285 = scalar_lea.vmem [#allocation8], %s284
        %p286 = pneg %p169
        %p287 = pneg %p166
        %s288 = sand.u32 %s28, 1
        %s289 = scalar_lea.sflag [#allocation9], %s288
        %s290 = sand.u32 %s156, 1
        %s291 = smul.addr %s290, 24
        %s292 = scalar_lea.vmem [#allocation10], %s291
        %p293 = scmp.eq.s32.totalorder %s33, 0
        // Predicated region
        $region37: #{tpu_custom_call.1} parent=27 // pred_check
          %p294 = pneg %p293
        $region38: #{tpu_custom_call.1} parent=27 // pred_check_branch
          %296 = sbr.rel (%p294) target = $region40
        $region39: #{tpu_custom_call.1} parent=27 // pred_region
          %297 = vst [vmem:[%s278] sm:$0xff] 0.0
          %298 = vst [vmem:[%s278 + $0x8] sm:$0xff] 0.0
          %299 = vst [vmem:[%s278 + $0x10] sm:$0xff] 0.0
          %300 = vst [vmem:[%s285] sm:$0xff] 0.0
          %301 = vst [vmem:[%s285 + $0x8] sm:$0xff] 0.0
          %302 = vst [vmem:[%s285 + $0x10] sm:$0xff] 0.0
          %303 = vst [vmem:[%s292] sm:$0xff] 0.0
          %304 = vst [vmem:[%s292 + $0x8] sm:$0xff] 0.0
          %305 = vst [vmem:[%s292 + $0x10] sm:$0xff] 0.0
        $region40: #{tpu_custom_call.1} parent=27 // pred_fallthru
          _
        %v306 = vld [vmem:[%s242] sm:$0xff]
        %v307 = vld [vmem:[%s242 + $0x8] sm:$0xff]
        %v308 = vld [vmem:[%s242 + $0x10] sm:$0xff]
        %v309 = vld [vmem:[%s242 + $0x18] sm:$0xff]
        %v310 = vld [vmem:[%s252] sm:$0xff]
        %v311 = vmax.f32 %v306, %v307
        %v312 = vmax.f32 %v308, %v309
        %v313 = vmax.f32 %v311, %v312
        %v314 = vsub.f32 %v306, %v313
        %v315 = vsub.f32 %v307, %v313
        %v316 = vsub.f32 %v308, %v313
        %v317 = vsub.f32 %v309, %v313
        %v318 = vmul.f32 %v314, 1.442695
        %v319 = vpow.pop %v318
        %v320 = vmul.f32 %v315, 1.442695
        %v321 = vpow.pop %v320
        %v322 = vmul.f32 %v316, 1.442695
        %v323 = vpow.pop %v322
        %v324 = vmul.f32 %v317, 1.442695
        %v325 = vpow.pop %v324
        %v326 = vadd.f32 %v319, %v321
        %v327 = vadd.f32 %v326, %v323
        %v328 = vadd.f32 %v327, %v325
        %v329 = vrcp.pop %v328
        %v330 = vmul.f32 %v328, %v329
        %v331 = vsub.f32 2.0, %v330
        %v332 = vmul.f32 %v329, %v331
        %v333 = vmul.f32 %v321, %v332
        %vm334 = vcmp.eq.s32.totalorder %v310, 1
        %v335 = vsel %vm334, 1, 0
        %v336 = vcvt.s32.f32 %v335
        %v337 = vld [vmem:[%s278] sm:$0xff]
        %v338 = vmul.f32 %v333, %v336
        %v339 = vadd.f32 %v337, %v338
        %340 = vst [vmem:[%s278] sm:$0xff] %v339
        %v341 = vld [vmem:[%s285] sm:$0xff]
        %v342 = vadd.f32 %v341, %v333
        %343 = vst [vmem:[%s285] sm:$0xff] %v342
        %v344 = vld [vmem:[%s292] sm:$0xff]
        %v345 = vadd.f32 %v344, %v336
        %346 = vst [vmem:[%s292] sm:$0xff] %v345
        %v347 = vmul.f32 %v323, %v332
        %vm348 = vcmp.eq.s32.totalorder %v310, 2
        %v349 = vsel %vm348, 1, 0
        %v350 = vcvt.s32.f32 %v349
        %s351 = scalar_lea.vmem %s278, 8 [#allocation7]
        %v352 = vld [vmem:[%s351] sm:$0xff]
        %v353 = vmul.f32 %v347, %v350
        %v354 = vadd.f32 %v352, %v353
        %355 = vst [vmem:[%s351] sm:$0xff] %v354
        %s356 = scalar_lea.vmem %s285, 8 [#allocation8]
        %v357 = vld [vmem:[%s356] sm:$0xff]
        %v358 = vadd.f32 %v357, %v347
        %359 = vst [vmem:[%s356] sm:$0xff] %v358
        %s360 = scalar_lea.vmem %s292, 8 [#allocation10]
        %v361 = vld [vmem:[%s360] sm:$0xff]
        %v362 = vadd.f32 %v361, %v350
        %363 = vst [vmem:[%s360] sm:$0xff] %v362
        %v364 = vmul.f32 %v325, %v332
        %vm365 = vcmp.eq.s32.totalorder %v310, 4
        %v366 = vsel %vm365, 1, 0
        %v367 = vcvt.s32.f32 %v366
        %s368 = scalar_lea.vmem %s278, 16 [#allocation7]
        %v369 = vld [vmem:[%s368] sm:$0xff]
        %v370 = vmul.f32 %v364, %v367
        %v371 = vadd.f32 %v369, %v370
        %372 = vst [vmem:[%s368] sm:$0xff] %v371
        %s373 = scalar_lea.vmem %s285, 16 [#allocation8]
        %v374 = vld [vmem:[%s373] sm:$0xff]
        %v375 = vadd.f32 %v374, %v364
        %376 = vst [vmem:[%s373] sm:$0xff] %v375
        %s377 = scalar_lea.vmem %s292, 16 [#allocation10]
        %v378 = vld [vmem:[%s377] sm:$0xff]
        %v379 = vadd.f32 %v378, %v367
        %380 = vst [vmem:[%s377] sm:$0xff] %v379
        %s381 = sand.u32 %s104, 1
        %s382 = scalar_lea.sflag [#allocation4], %s381
        %s383 = sand.u32 %s104, 1
        %s384 = smul.addr %s383, 24
        %s385 = scalar_lea.vmem [#allocation7], %s384
        %s386 = sand.u32 %s28, 1
        %s387 = scalar_lea.sflag [#allocation9], %s386
        %s388 = sand.u32 %s130, 1
        %s389 = smul.addr %s388, 24
        %s390 = scalar_lea.vmem [#allocation8], %s389
        %s391 = sand.u32 %s28, 1
        %s392 = scalar_lea.sflag [#allocation9], %s391
        %s393 = sand.u32 %s156, 1
        %s394 = smul.addr %s393, 24
        %s395 = scalar_lea.vmem [#allocation10], %s394
        // Predicated region
        $region41: #{tpu_custom_call.1} parent=27 // pred_check
          %p396 = pneg %p114
        $region42: #{tpu_custom_call.1} parent=27 // pred_check_branch
          %398 = sbr.rel (%p396) target = $region44
        $region43: #{tpu_custom_call.1} parent=27 // pred_region
          %400 = vsyncadd %s382, 0
          %s401 = smul.addr %s32, 3
          %s402 = smul.addr %s401, 8
          %s403 = scalar_lea.hbm %s2, %s402
          %s404 = sshll.u32 %s385, 4
          %s405 = int_to_ptr.vmem [resolvable:$true] %s404
          %s406 = sshll.u32 %s403, 4
          %s407 = int_to_ptr.hbm [resolvable:$true] %s406
          %412 = dma.vmem_to_hbm [thread:$0]  %s405, 384, %s407, %s382, 128, 128, 8
        $region44: #{tpu_custom_call.1} parent=27 // pred_fallthru
          _
        // Predicated region
        $region45: #{tpu_custom_call.1} parent=27 // pred_check
          %p413 = pneg %p140
        $region46: #{tpu_custom_call.1} parent=27 // pred_check_branch
          %415 = sbr.rel (%p413) target = $region48
        $region47: #{tpu_custom_call.1} parent=27 // pred_region
          %417 = vsyncadd %s387, 0
          %s418 = smul.addr %s32, 3
          %s419 = smul.addr %s418, 8
          %s420 = scalar_lea.hbm %s3, %s419
          %s421 = sshll.u32 %s390, 4
          %s422 = int_to_ptr.vmem [resolvable:$true] %s421
          %s423 = sshll.u32 %s420, 4
          %s424 = int_to_ptr.hbm [resolvable:$true] %s423
          %429 = dma.vmem_to_hbm [thread:$0]  %s422, 384, %s424, %s387, 128, 128, 8
        $region48: #{tpu_custom_call.1} parent=27 // pred_fallthru
          _
        // Predicated region
        $region49: #{tpu_custom_call.1} parent=27 // pred_check
          %p430 = pneg %p166
        $region50: #{tpu_custom_call.1} parent=27 // pred_check_branch
          %432 = sbr.rel (%p430) target = $region52
        $region51: #{tpu_custom_call.1} parent=27 // pred_region
          %434 = vsyncadd %s392, 0
          %s435 = smul.addr %s32, 3
          %s436 = smul.addr %s435, 8
          %s437 = scalar_lea.hbm %s4, %s436
          %s438 = sshll.u32 %s395, 4
          %s439 = int_to_ptr.vmem [resolvable:$true] %s438
          %s440 = sshll.u32 %s437, 4
          %s441 = int_to_ptr.hbm [resolvable:$true] %s440
          %446 = dma.vmem_to_hbm [thread:$0]  %s439, 384, %s441, %s392, 128, 128, 8
        $region52: #{tpu_custom_call.1} parent=27 // pred_fallthru
          _
      $region28: #{tpu_custom_call.1} parent=5 // pred_fallthru
        _
      %p447 = scmp.le.s32.totalorder 2, %s23
      // Predicated region
      $region53: #{tpu_custom_call.1} parent=5 // pred_check
        %p448 = pneg %p447
      $region54: #{tpu_custom_call.1} parent=5 // pred_check_branch
        %450 = sbr.rel (%p448) target = $region56
      $region55: #{tpu_custom_call.1} parent=5 // pred_region
        %s451 = ssub.s32 %s23, 2
        // Predicated region
        $region57: #{tpu_custom_call.1} parent=55 // pred_check
          %p452 = pneg %p120
        $region58: #{tpu_custom_call.1} parent=55 // pred_check_branch
          %454 = sbr.rel (%p452) target = $region60
        $region59: #{tpu_custom_call.1} parent=55 // pred_region
          %s455 = sand.u32 %s105, 1
          %s456 = scalar_lea.sflag [#allocation4], %s455
          %s457 = sand.u32 %s105, 1
          %s458 = smul.addr %s457, 24
          %s459 = scalar_lea.vmem [#allocation7], %s458
          %461 = dma.done %s456, 384
        $region60: #{tpu_custom_call.1} parent=55 // pred_fallthru
          _
        // Predicated region
        $region61: #{tpu_custom_call.1} parent=55 // pred_check
          %p462 = pneg %p146
        $region62: #{tpu_custom_call.1} parent=55 // pred_check_branch
          %464 = sbr.rel (%p462) target = $region64
        $region63: #{tpu_custom_call.1} parent=55 // pred_region
          %s465 = sand.u32 %s29, 1
          %s466 = scalar_lea.sflag [#allocation9], %s465
          %s467 = sand.u32 %s131, 1
          %s468 = smul.addr %s467, 24
          %s469 = scalar_lea.vmem [#allocation8], %s468
          %471 = dma.done %s466, 384
        $region64: #{tpu_custom_call.1} parent=55 // pred_fallthru
          _
        // Predicated region
        $region65: #{tpu_custom_call.1} parent=55 // pred_check
          %p472 = pneg %p172
        $region66: #{tpu_custom_call.1} parent=55 // pred_check_branch
          %474 = sbr.rel (%p472) target = $region68
        $region67: #{tpu_custom_call.1} parent=55 // pred_region
          %s475 = sand.u32 %s29, 1
          %s476 = scalar_lea.sflag [#allocation9], %s475
          %s477 = sand.u32 %s157, 1
          %s478 = smul.addr %s477, 24
          %s479 = scalar_lea.vmem [#allocation10], %s478
          %481 = dma.done %s476, 384
        $region68: #{tpu_custom_call.1} parent=55 // pred_fallthru
          _
      $region56: #{tpu_custom_call.1} parent=5 // pred_fallthru
        _
    $region6: #{tpu_custom_call.1} parent=1 // loop_footer
      %s27 = sadd.s32 1, %s23
    $region7: #{tpu_custom_call.1} parent=1 // loop_footer_branch
      %22 = sbr.rel target = $region3
    $region8: #{tpu_custom_call.1} parent=1 // loop_exit
      _
    %482 = vsyncpa [#allocation3], 1
    %s483 = scalar_lea.sflag [#allocation3], 1
    %484 = vsyncpa %s483, 1
    %485 = vsyncpa [#allocation6], 1
    %s486 = scalar_lea.sflag [#allocation6], 1
    %487 = vsyncpa %s486, 1
    %488 = vsyncpa [#allocation4], 1
    %s489 = scalar_lea.sflag [#allocation4], 1
    %490 = vsyncpa %s489, 1
    %491 = vsyncpa [#allocation9], 1
    %s492 = scalar_lea.sflag [#allocation9], 1
    %493 = vsyncpa %s492, 1

</llo_original>
